<compile_context>
chip_gen: v7x
topology: tpu7x:2x2x1
jax: 0.10.0
libtpu: 0.0.40
codegen_flags: <defaults>
</compile_context>

<pallas_src>
import functools

import jax
import jax.numpy as jnp
from jax import lax
from jax.experimental import pallas as pl
from jax.experimental.pallas import tpu as pltpu

LANE = 128
NEG_INF = -1e30  # f32-finite sentinel used to pad invalid logit columns of b2


def _round_up(x, m):
    return (x + m - 1) // m * m


def _sublane(dtype):
    # 8 sublanes per vreg for 32-bit, 16 for 16-bit packed dtypes.
    return 8 * (4 // jnp.dtype(dtype).itemsize)


# ---------------------------------------------------------------------------
# Kernel: one grid step == `chunk` RNN timesteps.  Weights are VMEM-resident
# across the whole grid (constant block index).  Hidden state is carried in
# the grid-resident hid_ref output buffer and threaded through the unrolled
# inner loop as a value.
# ---------------------------------------------------------------------------
def rnn_chunk_kernel(x_ref, h0_ref,
                     w1x_ref, w1h_ref, b1_ref,
                     w2_ref, b2_ref,
                     logp_ref, hid_ref,
                     *, chunk, t_total, compute_dtype):
    c = pl.program_id(0)

    # Initialize the carried hidden state from the h0 input on the first step.
    @pl.when(c == 0)
    def _():
        hid_ref[...] = h0_ref[...]

    # Resident weights: loaded from VMEM once per grid step (DMA'd only once
    # for the whole grid thanks to the constant index_map).
    w1x = w1x_ref[...]          # (Ip, Hp+Op)  compute_dtype
    w1h = w1h_ref[...]          # (Hp, Hp+Op)  compute_dtype
    b1 = b1_ref[...]            # (1,  Hp+Op)  f32
    w2 = w2_ref[...]            # (Hp+Op, Op)  compute_dtype
    b2 = b2_ref[...]            # (1,  Op)     f32 (-1e30 in padded columns)
    Hp = hid_ref.shape[-1]
    base_t = c * chunk

    def step(t, h):
        x = x_ref[t]                                        # (Bp, Ip)
        # Fused i2h|i2o.  Column layout of W1*: [0:H) -> i2h, [Hp:Hp+O) -> i2o,
        # so y is exactly the (padded) cat([hidden', out1]).
        # cat([x, h]) @ W1 is rewritten as x @ W1x + h @ W1h (no lane concat).
        # TODO(synk): on v6e/v7x a single K=256 dot via a contiguous (Bp, Ip+Hp)
        # VMEM scratch would halve the MXU pushes; split form kept (optimal v5e).
        y = (jnp.dot(x, w1x, preferred_element_type=jnp.float32)
             + jnp.dot(h.astype(compute_dtype), w1h,
                       preferred_element_type=jnp.float32)
             + b1)                                          # (Bp, Hp+Op) f32

        hidden_new = y[:, :Hp]                              # lane-aligned slice

        # o2o(cat([hidden', out1])) == y @ W2 (W2 rows pre-arranged to match y).
        out2 = (jnp.dot(y.astype(compute_dtype), w2,
                        preferred_element_type=jnp.float32)
                + b2)                                       # (Bp, Op) f32

        # TODO(synk): nn.Dropout(p=0.1) applied as eval-mode identity; training
        # mode would need pltpu.prng_seed / pltpu.prng_random_bits masking.

        # Numerically stable log_softmax.  Padded columns carry b2 = -1e30, so
        # they self-mask through max/exp with no per-step iota/where.
        m = jnp.max(out2, axis=1, keepdims=True)
        shifted = out2 - m
        denom = jnp.sum(jnp.exp(shifted), axis=1, keepdims=True)
        logp_ref[t] = shifted - jnp.log(denom)

        # Freeze the hidden state on tail-padding steps beyond the real T.
        return jnp.where(base_t + t < t_total, hidden_new, h)

    hid_ref[...] = lax.fori_loop(0, chunk, step, hid_ref[...], unroll=True)


# ---------------------------------------------------------------------------
# Offline weight packing (done ONCE per parameter set, outside the hot path).
# ---------------------------------------------------------------------------
def pack_params(params, compute_dtype=jnp.float32):
    """Pad + fuse the three Linear layers into MXU-friendly blocks.

    Column layout of the fused stage-1 weight: [0:H) = i2h, [Hp:Hp+O) = i2o.
    The stage-2 weight rows are rearranged to match that padded layout, and
    b2's padded columns are set to NEG_INF so the in-kernel log_softmax
    self-masks.  Weights go to `compute_dtype`; biases stay f32 (added to the
    f32 MXU accumulators; NEG_INF must stay finite).
    """
    H = params["w_i2h"].shape[1]
    O = params["w_i2o"].shape[1]
    I = params["w_i2h"].shape[0] - H
    Ip, Hp, Op = (_round_up(d, LANE) for d in (I, H, O))
    HOp = Hp + Op
    f32 = jnp.float32

    w1x = jnp.zeros((Ip, HOp), f32)
    w1x = w1x.at[:I, :H].set(params["w_i2h"][:I])
    w1x = w1x.at[:I, Hp:Hp + O].set(params["w_i2o"][:I])
    w1h = jnp.zeros((Hp, HOp), f32)
    w1h = w1h.at[:H, :H].set(params["w_i2h"][I:])
    w1h = w1h.at[:H, Hp:Hp + O].set(params["w_i2o"][I:])
    b1 = jnp.zeros((1, HOp), f32)
    b1 = b1.at[:, :H].set(params["b_i2h"])
    b1 = b1.at[:, Hp:Hp + O].set(params["b_i2o"])

    w2 = jnp.zeros((HOp, Op), f32)
    w2 = w2.at[:H, :O].set(params["w_o2o"][:H])
    w2 = w2.at[Hp:Hp + O, :O].set(params["w_o2o"][H:])
    b2 = jnp.full((1, Op), NEG_INF, f32)
    b2 = b2.at[:, :O].set(params["b_o2o"])

    packed = dict(w1x=w1x.astype(compute_dtype),
                  w1h=w1h.astype(compute_dtype),
                  w2=w2.astype(compute_dtype),
                  b1=b1, b2=b2)
    return packed, (I, H, O)


# ---------------------------------------------------------------------------
# Forward wrappers.
# ---------------------------------------------------------------------------
@functools.partial(jax.jit, static_argnames=("dims", "chunk"))
def rnn_forward_seq(x_seq, h0, packed, *, dims, chunk=32):
    """x_seq: (T, B, I) f32, h0: (B, H) f32, packed: pack_params() output.
       Returns (log_probs (T, B, O) f32, final hidden (B, H) f32)."""
    T, B, _ = x_seq.shape
    I, H, O = dims
    compute_dtype = packed["w1x"].dtype
    itemsize = jnp.dtype(compute_dtype).itemsize
    f32 = jnp.float32

    Ip = packed["w1x"].shape[0]
    Hp = packed["w1h"].shape[0]
    Op = packed["w2"].shape[1]
    HOp = Hp + Op

    sub = _sublane(compute_dtype)
    Bp = _round_up(max(B, sub), sub)

    chunk = min(chunk, T)
    n_chunks = (T + chunk - 1) // chunk
    Tp = n_chunks * chunk

    # Lane/sublane-dense padded activations (time padded up to a chunk multiple).
    x_pad = jnp.zeros((Tp, Bp, Ip), compute_dtype)
    x_pad = x_pad.at[:T, :B, :I].set(x_seq.astype(compute_dtype))
    h_pad = jnp.zeros((Bp, Hp), f32).at[:B, :H].set(h0)

    flops = Tp * (2 * Bp * (Ip + Hp) * HOp + 2 * Bp * HOp * Op)
    transcendentals = Tp * Bp * (Op + 1)
    bytes_accessed = (Tp * Bp * Ip * itemsize            # x in
                      + 4 * Tp * Bp * Op                 # log_probs out
                      + 4 * 2 * Bp * Hp                  # h0 in + hidden out
                      + ((Ip + Hp) * HOp + HOp * Op) * itemsize
                      + 4 * (HOp + Op))                  # biases

    kernel = functools.partial(rnn_chunk_kernel, chunk=chunk, t_total=T,
                               compute_dtype=compute_dtype)

    def resident(shape):
        # Constant block index -> loaded into VMEM once for the whole grid.
        return pl.BlockSpec(shape, lambda c: tuple(0 for _ in shape))

    logp_pad, hid_pad = pl.pallas_call(
        kernel,
        out_shape=(jax.ShapeDtypeStruct((Tp, Bp, Op), f32),
                   jax.ShapeDtypeStruct((Bp, Hp), f32)),
        grid=(n_chunks,),
        in_specs=[
            pl.BlockSpec((chunk, Bp, Ip), lambda c: (c, 0, 0)),  # x chunk
            resident((Bp, Hp)),                                  # h0
            resident((Ip, HOp)),                                 # W1x
            resident((Hp, HOp)),                                 # W1h
            resident((1, HOp)),                                  # b1
            resident((HOp, Op)),                                 # W2
            resident((1, Op)),                                   # b2
        ],
        out_specs=(
            pl.BlockSpec((chunk, Bp, Op), lambda c: (c, 0, 0)),  # log_probs
            resident((Bp, Hp)),                                  # carried hidden
        ),
        compiler_params=pltpu.CompilerParams(
            dimension_semantics=("arbitrary",),      # time is a recurrence
            vmem_limit_bytes=32 * 1024 * 1024),      # > v5e's 16 MiB default
        cost_estimate=pl.CostEstimate(flops=flops,
                                      transcendentals=transcendentals,
                                      bytes_accessed=bytes_accessed),
    )(x_pad, h_pad, packed["w1x"], packed["w1h"], packed["b1"],
      packed["w2"], packed["b2"])

    return logp_pad[:T, :B, :O], hid_pad[:B, :H]


def rnn_forward(x, h, packed, *, dims):
    """Single-step forward == the PyTorch module's forward(input, hidden)."""
    logp, hid = rnn_forward_seq(x[None], h, packed, dims=dims, chunk=1)
    return logp[0], hid


# ---------------------------------------------------------------------------
# Params + pure-JAX references
# ---------------------------------------------------------------------------
def init_params(key, input_size, hidden_size, output_size):
    """Deterministic synthetic params. Weights stored as (in, out) = torch W.T."""
    ks = jax.random.split(key, 6)

    def lin(kw, kb, fan_in, fan_out):
        bound = 1.0 / jnp.sqrt(fan_in)
        w = jax.random.uniform(kw, (fan_in, fan_out), jnp.float32, -bound, bound)
        b = jax.random.uniform(kb, (1, fan_out), jnp.float32, -bound, bound)
        return w, b

    w_i2h, b_i2h = lin(ks[0], ks[1], input_size + hidden_size, hidden_size)
    w_i2o, b_i2o = lin(ks[2], ks[3], input_size + hidden_size, output_size)
    w_o2o, b_o2o = lin(ks[4], ks[5], hidden_size + output_size, output_size)
    return dict(w_i2h=w_i2h, b_i2h=b_i2h,
                w_i2o=w_i2o, b_i2o=b_i2o,
                w_o2o=w_o2o, b_o2o=b_o2o)


def rnn_cell_ref(x, h, p):
    comb = jnp.concatenate([x, h], axis=1)
    hid = comb @ p["w_i2h"] + p["b_i2h"]
    out = comb @ p["w_i2o"] + p["b_i2o"]
    out = jnp.concatenate([hid, out], axis=1) @ p["w_o2o"] + p["b_o2o"]
    return jax.nn.log_softmax(out, axis=1), hid


def rnn_seq_ref(xs, h0, p):
    def step(h, x):
        lp, h2 = rnn_cell_ref(x, h, p)
        return h2, lp
    hT, lps = lax.scan(step, h0, xs)
    return lps, hT


def rnn_seq_ref_lowp(xs, h0, p, dtype):
    """Reference that emulates the kernel's low-precision-operand /
    f32-accumulate arithmetic (for validating the bf16 path)."""
    wa = p["w_i2h"].astype(dtype)
    wb = p["w_i2o"].astype(dtype)
    wc = p["w_o2o"].astype(dtype)

    def cell(x, h):
        comb = jnp.concatenate([x.astype(dtype), h.astype(dtype)], axis=1)
        hid = jnp.dot(comb, wa, preferred_element_type=jnp.float32) + p["b_i2h"]
        out = jnp.dot(comb, wb, preferred_element_type=jnp.float32) + p["b_i2o"]
        oc = jnp.concatenate([hid, out], axis=1).astype(dtype)
        out2 = jnp.dot(oc, wc, preferred_element_type=jnp.float32) + p["b_o2o"]
        return jax.nn.log_softmax(out2, axis=1), hid

    def step(h, x):
        lp, h2 = cell(x, h)
        return h2, lp
    hT, lps = lax.scan(step, h0, xs)
    return lps, hT


if __name__ == "__main__":
    B, I, H, O, T = 2, 16, 32, 16, 8
    key = jax.random.PRNGKey(0)
    k_x, k_p = jax.random.split(key, 2)

    xs = jax.random.normal(k_x, (T, B, I), dtype=jnp.float32)
    h0 = jnp.zeros((B, H), dtype=jnp.float32)          # initHidden()
    params = init_params(k_p, I, H, O)

    # ----- f32 path: exact module semantics -----
    packed_f32, dims = pack_params(params, jnp.float32)

    # Single step: exact semantics of RNN.forward(input, hidden).
    lp1, h1 = jax.block_until_ready(rnn_forward(xs[0], h0, packed_f32, dims=dims))
    ref_lp1, ref_h1 = rnn_cell_ref(xs[0], h0, params)
    assert jnp.allclose(lp1, ref_lp1, atol=1e-4), "single-step log_probs mismatch"
    assert jnp.allclose(h1, ref_h1, atol=1e-4), "single-step hidden mismatch"

    # Multi-step recurrence, chunk divides T (one grid step).
    ref_lps, ref_hT = rnn_seq_ref(xs, h0, params)
    lps, hT = jax.block_until_ready(
        rnn_forward_seq(xs, h0, packed_f32, dims=dims, chunk=8))
    assert jnp.allclose(lps, ref_lps, atol=1e-4), "sequence log_probs mismatch"
    assert jnp.allclose(hT, ref_hT, atol=1e-4), "sequence hidden mismatch"

    # Chunk that does NOT divide T (exercises the tail-freeze guard).
    lps3, hT3 = jax.block_until_ready(
        rnn_forward_seq(xs, h0, packed_f32, dims=dims, chunk=3))
    assert jnp.allclose(lps3, ref_lps, atol=1e-4), "tail-chunk log_probs mismatch"
    assert jnp.allclose(hT3, ref_hT, atol=1e-4), "tail-chunk hidden mismatch"

    # ----- bf16 weights/activations (MXU-native), f32 accum + softmax -----
    packed_bf16, dims_b = pack_params(params, jnp.bfloat16)
    lps_b, hT_b = jax.block_until_ready(
        rnn_forward_seq(xs, h0, packed_bf16, dims=dims_b, chunk=8))
    ref_lps_b, ref_hT_b = rnn_seq_ref_lowp(xs, h0, params, jnp.bfloat16)
    assert jnp.allclose(lps_b, ref_lps_b, atol=2e-2), "bf16 log_probs mismatch"
    assert jnp.allclose(hT_b, ref_hT_b, atol=2e-2), "bf16 hidden mismatch"

    print("KERNEL_OK")
</pallas_src>

<mosaic_0001>
module attributes {stable_mosaic.version = 11 : i64} {
  func.func @rnn_chunk_kernel(%arg0: i32, %arg1: memref<1x8x128xf32, #tpu.memory_space<vmem>>, %arg2: memref<8x128xf32, #tpu.memory_space<vmem>>, %arg3: memref<128x256xf32, #tpu.memory_space<vmem>>, %arg4: memref<128x256xf32, #tpu.memory_space<vmem>>, %arg5: memref<1x256xf32, #tpu.memory_space<vmem>>, %arg6: memref<256x128xf32, #tpu.memory_space<vmem>>, %arg7: memref<1x128xf32, #tpu.memory_space<vmem>>, %arg8: memref<1x8x128xf32, #tpu.memory_space<vmem>>, %arg9: memref<8x128xf32, #tpu.memory_space<vmem>>) attributes {dimension_semantics = [#tpu.dimension_semantics<arbitrary>], iteration_bounds = array<i64: 1>, scalar_prefetch = 0 : i64, scratch_operands = 0 : i64, tpu.core_type = #tpu.core_type<tc>, window_params = [{transform_indices = @transform_0, window_bounds = array<i64: 1, 8, 128>}, {pipeline_mode = #tpu.pipeline_mode<synchronous>, transform_indices = @transform_1, window_bounds = array<i64: 8, 128>}, {pipeline_mode = #tpu.pipeline_mode<synchronous>, transform_indices = @transform_2, window_bounds = array<i64: 128, 256>}, {pipeline_mode = #tpu.pipeline_mode<synchronous>, transform_indices = @transform_3, window_bounds = array<i64: 128, 256>}, {pipeline_mode = #tpu.pipeline_mode<synchronous>, transform_indices = @transform_4, window_bounds = array<i64: 1, 256>}, {pipeline_mode = #tpu.pipeline_mode<synchronous>, transform_indices = @transform_5, window_bounds = array<i64: 256, 128>}, {pipeline_mode = #tpu.pipeline_mode<synchronous>, transform_indices = @transform_6, window_bounds = array<i64: 1, 128>}, {transform_indices = @transform_7, window_bounds = array<i64: 1, 8, 128>}, {pipeline_mode = #tpu.pipeline_mode<synchronous>, transform_indices = @transform_8, window_bounds = array<i64: 8, 128>}]} {
    %c0_i32 = arith.constant 0 : i32
    %0 = arith.cmpi eq, %arg0, %c0_i32 : i32
    %1 = arith.extui %0 : i1 to i32
    %c0_i32_0 = arith.constant 0 : i32
    %2 = arith.cmpi ne, %1, %c0_i32_0 : i32
    scf.if %2 {
      %c0_25 = arith.constant 0 : index
      %c0_26 = arith.constant 0 : index
      %40 = vector.load %arg2[%c0_25, %c0_26] : memref<8x128xf32, #tpu.memory_space<vmem>>, vector<8x128xf32>
      %c0_27 = arith.constant 0 : index
      %c0_28 = arith.constant 0 : index
      %41 = vector.load %arg9[%c0_27, %c0_28] : memref<8x128xf32, #tpu.memory_space<vmem>>, vector<8x128xf32>
      tpu.vector_store %arg9[%c0_27, %c0_28], %40 {strides = array<i32>} : memref<8x128xf32, #tpu.memory_space<vmem>>, vector<8x128xf32>,
    } else {
    }
    %c0 = arith.constant 0 : index
    %c0_1 = arith.constant 0 : index
    %3 = vector.load %arg3[%c0, %c0_1] : memref<128x256xf32, #tpu.memory_space<vmem>>, vector<128x256xf32>
    %c0_2 = arith.constant 0 : index
    %c0_3 = arith.constant 0 : index
    %4 = vector.load %arg4[%c0_2, %c0_3] : memref<128x256xf32, #tpu.memory_space<vmem>>, vector<128x256xf32>
    %c0_4 = arith.constant 0 : index
    %c0_5 = arith.constant 0 : index
    %5 = vector.load %arg5[%c0_4, %c0_5] : memref<1x256xf32, #tpu.memory_space<vmem>>, vector<1x256xf32>
    %c0_6 = arith.constant 0 : index
    %c0_7 = arith.constant 0 : index
    %6 = vector.load %arg6[%c0_6, %c0_7] : memref<256x128xf32, #tpu.memory_space<vmem>>, vector<256x128xf32>
    %c0_8 = arith.constant 0 : index
    %c0_9 = arith.constant 0 : index
    %7 = vector.load %arg7[%c0_8, %c0_9] : memref<1x128xf32, #tpu.memory_space<vmem>>, vector<1x128xf32>
    %c1_i32 = arith.constant 1 : i32
    %8 = arith.muli %arg0, %c1_i32 : i32
    %c0_10 = arith.constant 0 : index
    %c0_11 = arith.constant 0 : index
    %9 = vector.load %arg9[%c0_10, %c0_11] : memref<8x128xf32, #tpu.memory_space<vmem>>, vector<8x128xf32>
    %c0_i32_12 = arith.constant 0 : i32
    %10 = arith.index_cast %c0_i32_12 : i32 to index
    %c0_13 = arith.constant 0 : index
    %c0_14 = arith.constant 0 : index
    %11 = vector.load %arg1[%10, %c0_13, %c0_14] : memref<1x8x128xf32, #tpu.memory_space<vmem>>, vector<1x8x128xf32>
    %12 = vector.shape_cast %11 : vector<1x8x128xf32> to vector<8x128xf32>
    %cst = arith.constant dense<0.000000e+00> : vector<8x256xf32>
    %13 = tpu.matmul %12, %3, %cst {dimension_numbers = #tpu.dot_dimension_numbers<[1], [0], [0], [1], [0, 0, 1, 1], [], []>} : vector<8x128xf32>, vector<128x256xf32>, vector<8x256xf32> -> vector<8x256xf32>
    %cst_15 = arith.constant dense<0.000000e+00> : vector<8x256xf32>
    %14 = tpu.matmul %9, %4, %cst_15 {dimension_numbers = #tpu.dot_dimension_numbers<[1], [0], [0], [1], [0, 0, 1, 1], [], []>} : vector<8x128xf32>, vector<128x256xf32>, vector<8x256xf32> -> vector<8x256xf32>
    %15 = arith.addf %13, %14 : vector<8x256xf32>
    %16 = vector.broadcast %5 : vector<1x256xf32> to vector<8x256xf32>
    %17 = arith.addf %15, %16 : vector<8x256xf32>
    %18 = vector.extract_strided_slice %17 {offsets = [0, 0], sizes = [8, 128], strides = [1, 1]} : vector<8x256xf32> to vector<8x128xf32>
    %cst_16 = arith.constant dense<0.000000e+00> : vector<8x128xf32>
    %19 = tpu.matmul %17, %6, %cst_16 {dimension_numbers = #tpu.dot_dimension_numbers<[1], [0], [0], [1], [0, 0, 1, 1], [], []>} : vector<8x256xf32>, vector<256x128xf32>, vector<8x128xf32> -> vector<8x128xf32>
    %20 = vector.broadcast %7 : vector<1x128xf32> to vector<8x128xf32>
    %21 = arith.addf %19, %20 : vector<8x128xf32>
    %cst_17 = arith.constant dense<0xFF800000> : vector<8xf32>
    %22 = vector.multi_reduction <maximumf>, %21, %cst_17 [1] : vector<8x128xf32> to vector<8xf32>
    %23 = vector.shape_cast %22 : vector<8xf32> to vector<8x1xf32>
    %24 = vector.broadcast %23 : vector<8x1xf32> to vector<8x128xf32>
    %25 = arith.subf %21, %24 : vector<8x128xf32>
    %26 = math.exp %25 : vector<8x128xf32>
    %cst_18 = arith.constant dense<0.000000e+00> : vector<8xf32>
    %27 = vector.multi_reduction <add>, %26, %cst_18 [1] : vector<8x128xf32> to vector<8xf32>
    %28 = vector.shape_cast %27 : vector<8xf32> to vector<8x1xf32>
    %29 = math.log %28 : vector<8x1xf32>
    %30 = vector.broadcast %29 : vector<8x1xf32> to vector<8x128xf32>
    %31 = arith.subf %25, %30 : vector<8x128xf32>
    %32 = arith.index_cast %c0_i32_12 : i32 to index
    %c0_19 = arith.constant 0 : index
    %c0_20 = arith.constant 0 : index
    %33 = vector.load %arg8[%32, %c0_19, %c0_20] : memref<1x8x128xf32, #tpu.memory_space<vmem>>, vector<1x8x128xf32>
    %34 = vector.shape_cast %33 : vector<1x8x128xf32> to vector<8x128xf32>
    %35 = vector.shape_cast %31 : vector<8x128xf32> to vector<1x8x128xf32>
    tpu.vector_store %arg8[%32, %c0_19, %c0_20], %35 {strides = array<i32>} : memref<1x8x128xf32, #tpu.memory_space<vmem>>, vector<1x8x128xf32>,
    %36 = arith.addi %8, %c0_i32_12 : i32
    %c1_i32_21 = arith.constant 1 : i32
    %37 = arith.cmpi slt, %36, %c1_i32_21 : i32
    %38 = arith.select %37, %18, %9 : vector<8x128xf32>
    %c1_i32_22 = arith.constant 1 : i32
    %c0_23 = arith.constant 0 : index
    %c0_24 = arith.constant 0 : index
    %39 = vector.load %arg9[%c0_23, %c0_24] : memref<8x128xf32, #tpu.memory_space<vmem>>, vector<8x128xf32>
    tpu.vector_store %arg9[%c0_23, %c0_24], %38 {strides = array<i32>} : memref<8x128xf32, #tpu.memory_space<vmem>>, vector<8x128xf32>,
    return
  }
  func.func @transform_0(%arg0: i32) -> (i32, i32, i32) {
    %c0_i32 = arith.constant 0 : i32
    %c0_i32_0 = arith.constant 0 : i32
    %c0_i32_1 = arith.constant 0 : i32
    return %arg0, %c0_i32, %c0_i32_0 : i32, i32, i32
  }
  func.func @transform_1(%arg0: i32) -> (i32, i32) {
    %c0_i32 = arith.constant 0 : i32
    %c0_i32_0 = arith.constant 0 : i32
    %c0_i32_1 = arith.constant 0 : i32
    return %c0_i32, %c0_i32_0 : i32, i32
  }
  func.func @transform_2(%arg0: i32) -> (i32, i32) {
    %c0_i32 = arith.constant 0 : i32
    %c0_i32_0 = arith.constant 0 : i32
    %c0_i32_1 = arith.constant 0 : i32
    return %c0_i32, %c0_i32_0 : i32, i32
  }
  func.func @transform_3(%arg0: i32) -> (i32, i32) {
    %c0_i32 = arith.constant 0 : i32
    %c0_i32_0 = arith.constant 0 : i32
    %c0_i32_1 = arith.constant 0 : i32
    return %c0_i32, %c0_i32_0 : i32, i32
  }
  func.func @transform_4(%arg0: i32) -> (i32, i32) {
    %c0_i32 = arith.constant 0 : i32
    %c0_i32_0 = arith.constant 0 : i32
    %c0_i32_1 = arith.constant 0 : i32
    return %c0_i32, %c0_i32_0 : i32, i32
  }
  func.func @transform_5(%arg0: i32) -> (i32, i32) {
    %c0_i32 = arith.constant 0 : i32
    %c0_i32_0 = arith.constant 0 : i32
    %c0_i32_1 = arith.constant 0 : i32
    return %c0_i32, %c0_i32_0 : i32, i32
  }
  func.func @transform_6(%arg0: i32) -> (i32, i32) {
    %c0_i32 = arith.constant 0 : i32
    %c0_i32_0 = arith.constant 0 : i32
    %c0_i32_1 = arith.constant 0 : i32
    return %c0_i32, %c0_i32_0 : i32, i32
  }
  func.func @transform_7(%arg0: i32) -> (i32, i32, i32) {
    %c0_i32 = arith.constant 0 : i32
    %c0_i32_0 = arith.constant 0 : i32
    %c0_i32_1 = arith.constant 0 : i32
    return %arg0, %c0_i32, %c0_i32_0 : i32, i32, i32
  }
  func.func @transform_8(%arg0: i32) -> (i32, i32) {
    %c0_i32 = arith.constant 0 : i32
    %c0_i32_0 = arith.constant 0 : i32
    %c0_i32_1 = arith.constant 0 : i32
    return %c0_i32, %c0_i32_0 : i32, i32
  }
}

</mosaic_0001>

<llo_original>
// kernel: rnn_forward_seq.1
$region0: #{rnn_forward_seq.1}
  #allocation0 [shape = 'u32[]', space=smem, size = 0x4, offset = 0x4, fixed_abs, tag = 'smem constant byte address 0x4 - core index']
  #allocation1 [shape = 'u32[144,128]{1,0:T(1,128)}', space=vmem, size = 0x12000, scoped, tag = 'internal scratch']
  %s0 = inlined_call_operand.vmem [shape: f32[1,8,128], index: 0, kind: input, shape index: {}]
  %s1 = inlined_call_operand.vmem [shape: f32[8,128], index: 1, kind: input, shape index: {}]
  %s2 = inlined_call_operand.hbm [shape: f32[128,256], index: 2, kind: input, shape index: {}]
  %s3 = inlined_call_operand.hbm [shape: f32[128,256], index: 3, kind: input, shape index: {}]
  %s4 = inlined_call_operand.vmem [shape: f32[1,256], index: 4, kind: input, shape index: {}]
  %s5 = inlined_call_operand.hbm [shape: f32[256,128], index: 5, kind: input, shape index: {}]
  %s6 = inlined_call_operand.vmem [shape: f32[1,128], index: 6, kind: input, shape index: {}]
  %s7 = inlined_call_operand.vmem [shape: f32[1,8,128], index: 7, kind: output, shape index: {0}]
  %s8 = inlined_call_operand.vmem [shape: f32[8,128], index: 8, kind: output, shape index: {1}]
  %9 = xla_tuple %s7, %s8
  %s10 = sld [smem:[#allocation0]]
  $region62: #{rnn_forward_seq.1} parent=0
    _
  %s12 = ssub.s32 1, %s10
  %s13 = scalar_select 0, %s12, %s10
  $region1: #{rnn_forward_seq.1} parent=0
    #allocation2 [shape = 'u8[131072]{0}', space=vmem, size = 0x20000, scoped, tag = 'input window, operand 2, single buffered']
    #allocation3 [shape = 's32[1]{0}', space=sflag, size = 0x4, scoped, tag = 'scoped memory for rnn_forward_seq.1']
    #allocation4 [shape = 'u8[131072]{0}', space=vmem, size = 0x20000, scoped, tag = 'input window, operand 3, single buffered']
    #allocation5 [shape = 's32[1]{0}', space=sflag, size = 0x4, scoped, tag = 'scoped memory for rnn_forward_seq.1']
    #allocation6 [shape = 'u8[131072]{0}', space=vmem, size = 0x20000, scoped, tag = 'input window, operand 5, single buffered']
    %14 = vsyncpa [#allocation3], 0
    %15 = vsyncpa [#allocation5], 0
    // Predicated region
    $region2: #{rnn_forward_seq.1} parent=1 // pred_check
      _
    $region3: #{rnn_forward_seq.1} parent=1 // pred_check_branch
      %17 = sbr.rel (0) target = $region5
    $region4: #{rnn_forward_seq.1} parent=1 // pred_region
      _
    $region5: #{rnn_forward_seq.1} parent=1 // pred_fallthru
      _
    // Predicated region
    $region6: #{rnn_forward_seq.1} parent=1 // pred_check
      _
    $region7: #{rnn_forward_seq.1} parent=1 // pred_check_branch
      %19 = sbr.rel (0) target = $region9
    $region8: #{rnn_forward_seq.1} parent=1 // pred_region
      _
    $region9: #{rnn_forward_seq.1} parent=1 // pred_fallthru
      _
    // Predicated region
    $region10: #{rnn_forward_seq.1} parent=1 // pred_check
      _
    $region11: #{rnn_forward_seq.1} parent=1 // pred_check_branch
      %21 = sbr.rel (0) target = $region13
    $region12: #{rnn_forward_seq.1} parent=1 // pred_region
      %s23 = ssub.s32 4096, 4096
      %24 = vsyncadd [#allocation3], %s23
      %s25 = sshll.u32 [#allocation2], 4
      %s26 = int_to_ptr.vmem [resolvable:$true] %s25
      %31 = dma.hbm_to_vmem [thread:$0]  %s2, 4096, %s26, [#allocation3], 256, 256, 16
    $region13: #{rnn_forward_seq.1} parent=1 // pred_fallthru
      _
    // Predicated region
    $region14: #{rnn_forward_seq.1} parent=1 // pred_check
      _
    $region15: #{rnn_forward_seq.1} parent=1 // pred_check_branch
      %33 = sbr.rel (0) target = $region17
    $region16: #{rnn_forward_seq.1} parent=1 // pred_region
      %s35 = ssub.s32 4096, 4096
      %36 = vsyncadd [#allocation5], %s35
      %s37 = sshll.u32 [#allocation4], 4
      %s38 = int_to_ptr.vmem [resolvable:$true] %s37
      %43 = dma.hbm_to_vmem [thread:$0]  %s3, 4096, %s38, [#allocation5], 256, 256, 16
    $region17: #{rnn_forward_seq.1} parent=1 // pred_fallthru
      _
    // Predicated region
    $region18: #{rnn_forward_seq.1} parent=1 // pred_check
      _
    $region19: #{rnn_forward_seq.1} parent=1 // pred_check_branch
      %45 = sbr.rel (0) target = $region21
    $region20: #{rnn_forward_seq.1} parent=1 // pred_region
      _
    $region21: #{rnn_forward_seq.1} parent=1 // pred_fallthru
      _
    // Predicated region
    $region22: #{rnn_forward_seq.1} parent=1 // pred_check
      _
    $region23: #{rnn_forward_seq.1} parent=1 // pred_check_branch
      %47 = sbr.rel (0) target = $region25
    $region24: #{rnn_forward_seq.1} parent=1 // pred_region
      %s49 = ssub.s32 4096, 4096
      %50 = vsyncadd [#allocation5], %s49
      %s51 = sshll.u32 [#allocation6], 4
      %s52 = int_to_ptr.vmem [resolvable:$true] %s51
      %57 = dma.hbm_to_vmem [thread:$0]  %s5, 4096, %s52, [#allocation5], 128, 128, 8
    $region25: #{rnn_forward_seq.1} parent=1 // pred_fallthru
      _
    // Predicated region
    $region26: #{rnn_forward_seq.1} parent=1 // pred_check
      _
    $region27: #{rnn_forward_seq.1} parent=1 // pred_check_branch
      %59 = sbr.rel (0) target = $region29
    $region28: #{rnn_forward_seq.1} parent=1 // pred_region
      _
    $region29: #{rnn_forward_seq.1} parent=1 // pred_fallthru
      _
    // Predicated region
    $region30: #{rnn_forward_seq.1} parent=1 // pred_check
      _
    $region31: #{rnn_forward_seq.1} parent=1 // pred_check_branch
      %61 = sbr.rel (0) target = $region33
    $region32: #{rnn_forward_seq.1} parent=1 // pred_region
      %62 = dma.done [#allocation3], 4096
    $region33: #{rnn_forward_seq.1} parent=1 // pred_fallthru
      _
    // Predicated region
    $region34: #{rnn_forward_seq.1} parent=1 // pred_check
      _
    $region35: #{rnn_forward_seq.1} parent=1 // pred_check_branch
      %64 = sbr.rel (0) target = $region37
    $region36: #{rnn_forward_seq.1} parent=1 // pred_region
      %65 = dma.done [#allocation5], 4096
    $region37: #{rnn_forward_seq.1} parent=1 // pred_fallthru
      _
    // Predicated region
    $region38: #{rnn_forward_seq.1} parent=1 // pred_check
      _
    $region39: #{rnn_forward_seq.1} parent=1 // pred_check_branch
      %67 = sbr.rel (0) target = $region41
    $region40: #{rnn_forward_seq.1} parent=1 // pred_region
      %68 = dma.done [#allocation5], 4096
    $region41: #{rnn_forward_seq.1} parent=1 // pred_fallthru
      _
    %p69 = scmp.eq.s32.totalorder 0, 0
    // Predicated region
    $region42: #{rnn_forward_seq.1} parent=1 // pred_check
      %p70 = pneg %p69
    $region43: #{rnn_forward_seq.1} parent=1 // pred_check_branch
      %72 = sbr.rel (%p70) target = $region45
    $region44: #{rnn_forward_seq.1} parent=1 // pred_region
      %v73 = vld [vmem:[%s1] sm:$0xff]
      %74 = vst [vmem:[%s8] sm:$0xff] %v73
    $region45: #{rnn_forward_seq.1} parent=1 // pred_fallthru
      _
    %v75 = vld [vmem:[#allocation2] sm:$0xff]
    %v76 = vld [vmem:[#allocation2 + $0x8] sm:$0xff]
    %v77 = vld [vmem:[#allocation2 + $0x10] sm:$0xff]
    %v78 = vld [vmem:[#allocation2 + $0x18] sm:$0xff]
    %v79 = vld [vmem:[#allocation2 + $0x20] sm:$0xff]
    %v80 = vld [vmem:[#allocation2 + $0x28] sm:$0xff]
    %v81 = vld [vmem:[#allocation2 + $0x30] sm:$0xff]
    %v82 = vld [vmem:[#allocation2 + $0x38] sm:$0xff]
    %v83 = vld [vmem:[#allocation2 + $0x40] sm:$0xff]
    %v84 = vld [vmem:[#allocation2 + $0x48] sm:$0xff]
    %v85 = vld [vmem:[#allocation2 + $0x50] sm:$0xff]
    %v86 = vld [vmem:[#allocation2 + $0x58] sm:$0xff]
    %v87 = vld [vmem:[#allocation2 + $0x60] sm:$0xff]
    %v88 = vld [vmem:[#allocation2 + $0x68] sm:$0xff]
    %v89 = vld [vmem:[#allocation2 + $0x70] sm:$0xff]
    %v90 = vld [vmem:[#allocation2 + $0x78] sm:$0xff]
    %v91 = vld [vmem:[#allocation2 + $0x80] sm:$0xff]
    %v92 = vld [vmem:[#allocation2 + $0x88] sm:$0xff]
    %v93 = vld [vmem:[#allocation2 + $0x90] sm:$0xff]
    %v94 = vld [vmem:[#allocation2 + $0x98] sm:$0xff]
    %v95 = vld [vmem:[#allocation2 + $0xa0] sm:$0xff]
    %v96 = vld [vmem:[#allocation2 + $0xa8] sm:$0xff]
    %v97 = vld [vmem:[#allocation2 + $0xb0] sm:$0xff]
    %v98 = vld [vmem:[#allocation2 + $0xb8] sm:$0xff]
    %v99 = vld [vmem:[#allocation2 + $0xc0] sm:$0xff]
    %v100 = vld [vmem:[#allocation2 + $0xc8] sm:$0xff]
    %v101 = vld [vmem:[#allocation2 + $0xd0] sm:$0xff]
    %v102 = vld [vmem:[#allocation2 + $0xd8] sm:$0xff]
    %v103 = vld [vmem:[#allocation2 + $0xe0] sm:$0xff]
    %v104 = vld [vmem:[#allocation2 + $0xe8] sm:$0xff]
    %v105 = vld [vmem:[#allocation2 + $0xf0] sm:$0xff]
    %v106 = vld [vmem:[#allocation2 + $0xf8] sm:$0xff]
    %v107 = vld [vmem:[#allocation4] sm:$0xff]
    %v108 = vld [vmem:[#allocation4 + $0x8] sm:$0xff]
    %v109 = vld [vmem:[#allocation4 + $0x10] sm:$0xff]
    %v110 = vld [vmem:[#allocation4 + $0x18] sm:$0xff]
    %v111 = vld [vmem:[#allocation4 + $0x20] sm:$0xff]
    %v112 = vld [vmem:[#allocation4 + $0x28] sm:$0xff]
    %v113 = vld [vmem:[#allocation4 + $0x30] sm:$0xff]
    %v114 = vld [vmem:[#allocation4 + $0x38] sm:$0xff]
    %v115 = vld [vmem:[#allocation4 + $0x40] sm:$0xff]
    %v116 = vld [vmem:[#allocation4 + $0x48] sm:$0xff]
    %v117 = vld [vmem:[#allocation4 + $0x50] sm:$0xff]
    %v118 = vld [vmem:[#allocation4 + $0x58] sm:$0xff]
    %v119 = vld [vmem:[#allocation4 + $0x60] sm:$0xff]
    %v120 = vld [vmem:[#allocation4 + $0x68] sm:$0xff]
    %v121 = vld [vmem:[#allocation4 + $0x70] sm:$0xff]
    %v122 = vld [vmem:[#allocation4 + $0x78] sm:$0xff]
    %v123 = vld [vmem:[#allocation4 + $0x80] sm:$0xff]
    %v124 = vld [vmem:[#allocation4 + $0x88] sm:$0xff]
    %v125 = vld [vmem:[#allocation4 + $0x90] sm:$0xff]
    %v126 = vld [vmem:[#allocation4 + $0x98] sm:$0xff]
    %v127 = vld [vmem:[#allocation4 + $0xa0] sm:$0xff]
    %v128 = vld [vmem:[#allocation4 + $0xa8] sm:$0xff]
    %v129 = vld [vmem:[#allocation4 + $0xb0] sm:$0xff]
    %v130 = vld [vmem:[#allocation4 + $0xb8] sm:$0xff]
    %v131 = vld [vmem:[#allocation4 + $0xc0] sm:$0xff]
    %v132 = vld [vmem:[#allocation4 + $0xc8] sm:$0xff]
    %v133 = vld [vmem:[#allocation4 + $0xd0] sm:$0xff]
    %v134 = vld [vmem:[#allocation4 + $0xd8] sm:$0xff]
    %v135 = vld [vmem:[#allocation4 + $0xe0] sm:$0xff]
    %v136 = vld [vmem:[#allocation4 + $0xe8] sm:$0xff]
    %v137 = vld [vmem:[#allocation4 + $0xf0] sm:$0xff]
    %v138 = vld [vmem:[#allocation4 + $0xf8] sm:$0xff]
    %v139 = vld [vmem:[%s4] sm:$0x3]
    %v140 = vld [vmem:[#allocation6] sm:$0xff]
    %v141 = vld [vmem:[#allocation6 + $0x8] sm:$0xff]
    %v142 = vld [vmem:[#allocation6 + $0x10] sm:$0xff]
    %v143 = vld [vmem:[#allocation6 + $0x18] sm:$0xff]
    %v144 = vld [vmem:[#allocation6 + $0x20] sm:$0xff]
    %v145 = vld [vmem:[#allocation6 + $0x28] sm:$0xff]
    %v146 = vld [vmem:[#allocation6 + $0x30] sm:$0xff]
    %v147 = vld [vmem:[#allocation6 + $0x38] sm:$0xff]
    %v148 = vld [vmem:[#allocation6 + $0x40] sm:$0xff]
    %v149 = vld [vmem:[#allocation6 + $0x48] sm:$0xff]
    %v150 = vld [vmem:[#allocation6 + $0x50] sm:$0xff]
    %v151 = vld [vmem:[#allocation6 + $0x58] sm:$0xff]
    %v152 = vld [vmem:[#allocation6 + $0x60] sm:$0xff]
    %v153 = vld [vmem:[#allocation6 + $0x68] sm:$0xff]
    %v154 = vld [vmem:[#allocation6 + $0x70] sm:$0xff]
    %v155 = vld [vmem:[#allocation6 + $0x78] sm:$0xff]
    %v156 = vld [vmem:[#allocation6 + $0x80] sm:$0xff]
    %v157 = vld [vmem:[#allocation6 + $0x88] sm:$0xff]
    %v158 = vld [vmem:[#allocation6 + $0x90] sm:$0xff]
    %v159 = vld [vmem:[#allocation6 + $0x98] sm:$0xff]
    %v160 = vld [vmem:[#allocation6 + $0xa0] sm:$0xff]
    %v161 = vld [vmem:[#allocation6 + $0xa8] sm:$0xff]
    %v162 = vld [vmem:[#allocation6 + $0xb0] sm:$0xff]
    %v163 = vld [vmem:[#allocation6 + $0xb8] sm:$0xff]
    %v164 = vld [vmem:[#allocation6 + $0xc0] sm:$0xff]
    %v165 = vld [vmem:[#allocation6 + $0xc8] sm:$0xff]
    %v166 = vld [vmem:[#allocation6 + $0xd0] sm:$0xff]
    %v167 = vld [vmem:[#allocation6 + $0xd8] sm:$0xff]
    %v168 = vld [vmem:[#allocation6 + $0xe0] sm:$0xff]
    %v169 = vld [vmem:[#allocation6 + $0xe8] sm:$0xff]
    %v170 = vld [vmem:[#allocation6 + $0xf0] sm:$0xff]
    %v171 = vld [vmem:[#allocation6 + $0xf8] sm:$0xff]
    %v172 = vld [vmem:[%s6] sm:$0x1]
    %v173 = vld [vmem:[%s8] sm:$0xff]
    %v174 = vld [vmem:[%s0] sm:$0xff]
    %175 = vmatprep.subr.mxu0 %v108
    %176 = vmatpush1.msra.mxu0 %v107
    %177 = vmatprep.subr.mxu0 %v110
    %178 = vmatpush1.msra.mxu0 %v109
    %179 = vmatprep.subr.mxu0 %v112
    %180 = vmatpush1.msra.mxu0 %v111
    %181 = vmatprep.subr.mxu0 %v114
    %182 = vmatpush1.msra.mxu0 %v113
    %183 = vmatprep.subr.mxu0 %v116
    %184 = vmatpush1.msra.mxu0 %v115
    %185 = vmatprep.subr.mxu0 %v118
    %186 = vmatpush1.msra.mxu0 %v117
    %187 = vmatprep.subr.mxu0 %v120
    %188 = vmatpush1.msra.mxu0 %v119
    %189 = vmatprep.subr.mxu0 %v122
    %190 = vmatpush1.msra.mxu0 %v121
    %191 = vmatprep.subr.mxu0 %v124
    %192 = vmatpush1.msra.mxu0 %v123
    %193 = vmatprep.subr.mxu0 %v126
    %194 = vmatpush1.msra.mxu0 %v125
    %195 = vmatprep.subr.mxu0 %v128
    %196 = vmatpush1.msra.mxu0 %v127
    %197 = vmatprep.subr.mxu0 %v130
    %198 = vmatpush1.msra.mxu0 %v129
    %199 = vmatprep.subr.mxu0 %v132
    %200 = vmatpush1.msra.mxu0 %v131
    %201 = vmatprep.subr.mxu0 %v134
    %202 = vmatpush1.msra.mxu0 %v133
    %203 = vmatprep.subr.mxu0 %v136
    %204 = vmatpush1.msra.mxu0 %v135
    %205 = vmatprep.subr.mxu0 %v138
    %206 = vmatpush1.msra.mxu0 %v137
    %207 = vmatprep.subr.mxu0 0.0
    %208 = vmatpush1.msra.mxu0 0.0
    %209 = vmatprep.subr.mxu0 0.0
    %210 = vmatpush1.msra.mxu0 0.0
    %211 = vmatprep.subr.mxu0 0.0
    %212 = vmatpush1.msra.mxu0 0.0
    %213 = vmatprep.subr.mxu0 0.0
    %214 = vmatpush1.msra.mxu0 0.0
    %215 = vmatprep.subr.mxu0 0.0
    %216 = vmatpush1.msra.mxu0 0.0
    %217 = vmatprep.subr.mxu0 0.0
    %218 = vmatpush1.msra.mxu0 0.0
    %219 = vmatprep.subr.mxu0 0.0
    %220 = vmatpush1.msra.mxu0 0.0
    %221 = vmatprep.subr.mxu0 0.0
    %222 = vmatpush1.msra.mxu0 0.0
    %223 = vmatprep.subr.mxu0 0.0
    %224 = vmatpush1.msra.mxu0 0.0
    %225 = vmatprep.subr.mxu0 0.0
    %226 = vmatpush1.msra.mxu0 0.0
    %227 = vmatprep.subr.mxu0 0.0
    %228 = vmatpush1.msra.mxu0 0.0
    %229 = vmatprep.subr.mxu0 0.0
    %230 = vmatpush1.msra.mxu0 0.0
    %231 = vmatprep.subr.mxu0 0.0
    %232 = vmatpush1.msra.mxu0 0.0
    %233 = vmatprep.subr.mxu0 0.0
    %234 = vmatpush1.msra.mxu0 0.0
    %235 = vmatprep.subr.mxu0 0.0
    %236 = vmatpush1.msra.mxu0 0.0
    %237 = vmatprep.subr.mxu0 0.0
    %238 = vmatpush1.msra.mxu0 0.0
    %239 = vmatprep.mubr.f32.mxu0 0.0
    %240 = vmatmul.mubr.f32.gmra.mrb[0].mxu0 %v173
    %v241 = vpop.f32.mrb[0].mxu0
    %v242 = vadd.f32 0.0, %v241
    %v243 = vpop.f32.mrb[0].mxu0
    %v244 = vadd.f32 0.0, %v243
    %245 = vdwg.mxu0
    %246 = vmatprep.subr.mxu0 %v76
    %247 = vmatpush1.msra.mxu0 %v75
    %248 = vmatprep.subr.mxu0 %v78
    %249 = vmatpush1.msra.mxu0 %v77
    %250 = vmatprep.subr.mxu0 %v80
    %251 = vmatpush1.msra.mxu0 %v79
    %252 = vmatprep.subr.mxu0 %v82
    %253 = vmatpush1.msra.mxu0 %v81
    %254 = vmatprep.subr.mxu0 %v84
    %255 = vmatpush1.msra.mxu0 %v83
    %256 = vmatprep.subr.mxu0 %v86
    %257 = vmatpush1.msra.mxu0 %v85
    %258 = vmatprep.subr.mxu0 %v88
    %259 = vmatpush1.msra.mxu0 %v87
    %260 = vmatprep.subr.mxu0 %v90
    %261 = vmatpush1.msra.mxu0 %v89
    %262 = vmatprep.subr.mxu0 %v92
    %263 = vmatpush1.msra.mxu0 %v91
    %264 = vmatprep.subr.mxu0 %v94
    %265 = vmatpush1.msra.mxu0 %v93
    %266 = vmatprep.subr.mxu0 %v96
    %267 = vmatpush1.msra.mxu0 %v95
    %268 = vmatprep.subr.mxu0 %v98
    %269 = vmatpush1.msra.mxu0 %v97
    %270 = vmatprep.subr.mxu0 %v100
    %271 = vmatpush1.msra.mxu0 %v99
    %272 = vmatprep.subr.mxu0 %v102
    %273 = vmatpush1.msra.mxu0 %v101
    %274 = vmatprep.subr.mxu0 %v104
    %275 = vmatpush1.msra.mxu0 %v103
    %276 = vmatprep.subr.mxu0 %v106
    %277 = vmatpush1.msra.mxu0 %v105
    %278 = vmatprep.subr.mxu0 0.0
    %279 = vmatpush1.msra.mxu0 0.0
    %280 = vmatprep.subr.mxu0 0.0
    %281 = vmatpush1.msra.mxu0 0.0
    %282 = vmatprep.subr.mxu0 0.0
    %283 = vmatpush1.msra.mxu0 0.0
    %284 = vmatprep.subr.mxu0 0.0
    %285 = vmatpush1.msra.mxu0 0.0
    %286 = vmatprep.subr.mxu0 0.0
    %287 = vmatpush1.msra.mxu0 0.0
    %288 = vmatprep.subr.mxu0 0.0
    %289 = vmatpush1.msra.mxu0 0.0
    %290 = vmatprep.subr.mxu0 0.0
    %291 = vmatpush1.msra.mxu0 0.0
    %292 = vmatprep.subr.mxu0 0.0
    %293 = vmatpush1.msra.mxu0 0.0
    %294 = vmatprep.subr.mxu0 0.0
    %295 = vmatpush1.msra.mxu0 0.0
    %296 = vmatprep.subr.mxu0 0.0
    %297 = vmatpush1.msra.mxu0 0.0
    %298 = vmatprep.subr.mxu0 0.0
    %299 = vmatpush1.msra.mxu0 0.0
    %300 = vmatprep.subr.mxu0 0.0
    %301 = vmatpush1.msra.mxu0 0.0
    %302 = vmatprep.subr.mxu0 0.0
    %303 = vmatpush1.msra.mxu0 0.0
    %304 = vmatprep.subr.mxu0 0.0
    %305 = vmatpush1.msra.mxu0 0.0
    %306 = vmatprep.subr.mxu0 0.0
    %307 = vmatpush1.msra.mxu0 0.0
    %308 = vmatprep.subr.mxu0 0.0
    %309 = vmatpush1.msra.mxu0 0.0
    %310 = vmatprep.mubr.f32.mxu0 0.0
    %311 = vmatmul.mubr.f32.gmra.mrb[0].mxu0 %v174
    %v312 = vpop.f32.mrb[0].mxu0
    %v313 = vadd.f32 %v242, %v312
    %v314 = vpop.f32.mrb[0].mxu0
    %v315 = vadd.f32 %v244, %v314
    %316 = vdwg.mxu0
    %v318 = vlaneseq
    %v319 = vshrl.u32 %v318, 7
    %v320 = vsub.s32 0, %v319
    %v321 = vrot.slane %v139, %v320
    %v322 = vlaneseq
    %v323 = vshrl.u32 %v322, 7
    %v324 = vsub.s32 1, %v323
    %v325 = vrot.slane %v139, %v324
    %v328 = vadd.f32 %v313, %v321
    %v329 = vadd.f32 %v315, %v325
    %v331 = vlaneseq
    %v332 = vshrl.u32 %v331, 7
    %v333 = vsub.s32 0, %v332
    %v334 = vrot.slane %v172, %v333
    %336 = vmatprep.subr.mxu0 0.0
    %337 = vmatpush1.msra.mxu0 %v140
    %338 = vmatprep.subr.mxu0 0.0
    %339 = vmatpush1.msra.mxu0 %v141
    %340 = vmatprep.subr.mxu0 0.0
    %341 = vmatpush1.msra.mxu0 %v142
    %342 = vmatprep.subr.mxu0 0.0
    %343 = vmatpush1.msra.mxu0 %v143
    %344 = vmatprep.subr.mxu0 0.0
    %345 = vmatpush1.msra.mxu0 %v144
    %346 = vmatprep.subr.mxu0 0.0
    %347 = vmatpush1.msra.mxu0 %v145
    %348 = vmatprep.subr.mxu0 0.0
    %349 = vmatpush1.msra.mxu0 %v146
    %350 = vmatprep.subr.mxu0 0.0
    %351 = vmatpush1.msra.mxu0 %v147
    %352 = vmatprep.subr.mxu0 0.0
    %353 = vmatpush1.msra.mxu0 %v148
    %354 = vmatprep.subr.mxu0 0.0
    %355 = vmatpush1.msra.mxu0 %v149
    %356 = vmatprep.subr.mxu0 0.0
    %357 = vmatpush1.msra.mxu0 %v150
    %358 = vmatprep.subr.mxu0 0.0
    %359 = vmatpush1.msra.mxu0 %v151
    %360 = vmatprep.subr.mxu0 0.0
    %361 = vmatpush1.msra.mxu0 %v152
    %362 = vmatprep.subr.mxu0 0.0
    %363 = vmatpush1.msra.mxu0 %v153
    %364 = vmatprep.subr.mxu0 0.0
    %365 = vmatpush1.msra.mxu0 %v154
    %366 = vmatprep.subr.mxu0 0.0
    %367 = vmatpush1.msra.mxu0 %v155
    %368 = vmatprep.subr.mxu0 0.0
    %369 = vmatpush1.msra.mxu0 %v156
    %370 = vmatprep.subr.mxu0 0.0
    %371 = vmatpush1.msra.mxu0 %v157
    %372 = vmatprep.subr.mxu0 0.0
    %373 = vmatpush1.msra.mxu0 %v158
    %374 = vmatprep.subr.mxu0 0.0
    %375 = vmatpush1.msra.mxu0 %v159
    %376 = vmatprep.subr.mxu0 0.0
    %377 = vmatpush1.msra.mxu0 %v160
    %378 = vmatprep.subr.mxu0 0.0
    %379 = vmatpush1.msra.mxu0 %v161
    %380 = vmatprep.subr.mxu0 0.0
    %381 = vmatpush1.msra.mxu0 %v162
    %382 = vmatprep.subr.mxu0 0.0
    %383 = vmatpush1.msra.mxu0 %v163
    %384 = vmatprep.subr.mxu0 0.0
    %385 = vmatpush1.msra.mxu0 %v164
    %386 = vmatprep.subr.mxu0 0.0
    %387 = vmatpush1.msra.mxu0 %v165
    %388 = vmatprep.subr.mxu0 0.0
    %389 = vmatpush1.msra.mxu0 %v166
    %390 = vmatprep.subr.mxu0 0.0
    %391 = vmatpush1.msra.mxu0 %v167
    %392 = vmatprep.subr.mxu0 0.0
    %393 = vmatpush1.msra.mxu0 %v168
    %394 = vmatprep.subr.mxu0 0.0
    %395 = vmatpush1.msra.mxu0 %v169
    %396 = vmatprep.subr.mxu0 0.0
    %397 = vmatpush1.msra.mxu0 %v170
    %398 = vmatprep.subr.mxu0 0.0
    %399 = vmatpush1.msra.mxu0 %v171
    %400 = vmatprep.mubr.f32.mxu0 %v329
    %401 = vmatmul.mubr.f32.gmra.mrb[0].mxu0 %v328
    %v402 = vpop.f32.mrb[0].mxu0
    %v403 = vadd.f32 %v334, %v402
    %v404 = vpop.f32.mrb[0].mxu0
    %405 = vdwg.mxu0
    %406 = vmax.xlane.f32.xlu0 %v403
    %v407 = vpop.xlane.xlu0 %406
    %v408 = vsub.f32 %v403, %v407
    %v409 = vmul.f32 %v408, 1.442695
    %v410 = vpow.pop %v409
    %411 = vadd.xlane.f32.xlu0 %v410
    %v412 = vpop.xlane.xlu0 %411
    %v413 = vlog2.pop %v412
    %v414 = vmul.f32 %v413, 0.6931472
    %v415 = vsub.f32 %v408, %v414
    %416 = vst [vmem:[%s7] sm:$0xff] %v415
    %p417 = scmp.lt.s32.totalorder 0, 1
    %s418 = scalar_select %p417, 1, 0
    %v419 = vstv %s418
    %vm420 = vcmp.eq.s32.totalorder %v419, 1
    %v421 = vsel %vm420, %v328, %v173
    %422 = vst [vmem:[%s8] sm:$0xff] %v421
    // Predicated region
    $region46: #{rnn_forward_seq.1} parent=1 // pred_check
      _
    $region47: #{rnn_forward_seq.1} parent=1 // pred_check_branch
      %424 = sbr.rel (0) target = $region49
    $region48: #{rnn_forward_seq.1} parent=1 // pred_region
      _
    $region49: #{rnn_forward_seq.1} parent=1 // pred_fallthru
      _
    // Predicated region
    $region50: #{rnn_forward_seq.1} parent=1 // pred_check
      _
    $region51: #{rnn_forward_seq.1} parent=1 // pred_check_branch
      %426 = sbr.rel (0) target = $region53
    $region52: #{rnn_forward_seq.1} parent=1 // pred_region
      _
    $region53: #{rnn_forward_seq.1} parent=1 // pred_fallthru
      _
    // Predicated region
    $region54: #{rnn_forward_seq.1} parent=1 // pred_check
      _
    $region55: #{rnn_forward_seq.1} parent=1 // pred_check_branch
      %428 = sbr.rel (0) target = $region57
    $region56: #{rnn_forward_seq.1} parent=1 // pred_region
      _
    $region57: #{rnn_forward_seq.1} parent=1 // pred_fallthru
      _
    // Predicated region
    $region58: #{rnn_forward_seq.1} parent=1 // pred_check
      _
    $region59: #{rnn_forward_seq.1} parent=1 // pred_check_branch
      %430 = sbr.rel (0) target = $region61
    $region60: #{rnn_forward_seq.1} parent=1 // pred_region
      _
    $region61: #{rnn_forward_seq.1} parent=1 // pred_fallthru
      _
    %431 = vsyncpa [#allocation3], 1
    %432 = vsyncpa [#allocation5], 1

</llo_original>
